<compile_context>
chip_gen: v6e
topology: v6e:2x2x1
jax: 0.10.0
libtpu: 0.0.40
codegen_flags: <defaults>
</compile_context>

<pallas_src>
import functools

import jax
import jax.numpy as jnp
from jax.experimental import pallas as pl
from jax.experimental.pallas import tpu as pltpu

LN_EPS = 1e-5                 # PyTorch nn.LayerNorm default
_ROW_BUDGET_BYTES = 12 << 20  # row-dependent VMEM budget (safe on v5e default)
_VMEM_LIMIT_BYTES = 32 << 20  # explicit scoped-VMEM limit (<= v7x physical)
_WEIGHT_SINGLE_BUFFER_BYTES = 4 << 20


def _round_up(x, m):
    return (x + m - 1) // m * m


def _choose_row_tile(m, per_row_bytes, *, sublane=16, budget=_ROW_BUDGET_BYTES):
    """Pick (TM, padded_M).  TM is VMEM-budgeted; prefer >=4, then >=2 steps."""
    cands = [t for t in (1024, 512, 256, 128, 64, 32, 16) if t % sublane == 0]
    fitting = [t for t in cands if t * per_row_bytes <= budget] or [sublane]
    for min_steps in (4, 2, 1):
        for t in fitting:                       # largest first
            if m % t == 0 and m // t >= min_steps:
                return t, m
    for t in fitting:                           # ragged M: pad, keep >=2 steps
        if t < m:
            return t, _round_up(m, t)
    t = fitting[-1]
    return t, _round_up(m, t)


def _patch_embed_kernel(x_ref, w_ref, bias_ref, g2_ref, b2_ref, o_ref):
    # x_ref: (TM, patch_dim) bf16 tile of patchified rows.
    x = x_ref[...].astype(jnp.float32)

    # --- LayerNorm over patch_dim (norm1; affine folded into W'/bias') ---
    mu1 = jnp.mean(x, axis=-1, keepdims=True)
    xc = x - mu1
    var1 = jnp.mean(xc * xc, axis=-1, keepdims=True)   # centered form (stable)
    xn = xc * jax.lax.rsqrt(var1 + LN_EPS)

    # --- Linear (g1 folded in): patch_dim -> embed_dim, bf16 operands on MXU ---
    y = jnp.dot(xn.astype(jnp.bfloat16), w_ref[...],
                preferred_element_type=jnp.float32)
    y = y + bias_ref[...]

    # --- LayerNorm over embed_dim (norm2) ---
    mu2 = jnp.mean(y, axis=-1, keepdims=True)
    yc = y - mu2
    var2 = jnp.mean(yc * yc, axis=-1, keepdims=True)
    out = yc * jax.lax.rsqrt(var2 + LN_EPS) * g2_ref[...] + b2_ref[...]

    o_ref[...] = out.astype(o_ref.dtype)


@functools.partial(jax.jit, static_argnames=("patch_size",))
def patch_embedding_forward(x, params, *, patch_size):
    """x: (B, C, H, W) NCHW.  Returns (B, N, embed_dim) in x.dtype."""
    g1, b1, w_lin, bias_lin, g2, b2 = params
    B, C, H, W = x.shape
    P = patch_size
    h, w = H // P, W // P
    n_patches = h * w
    patch_dim = P * P * C
    embed_dim = w_lin.shape[0]                 # nn.Linear weight is (out, in)
    out_dtype = x.dtype
    out_bytes = jnp.dtype(out_dtype).itemsize

    # Patchify 'b c (h hp) (w wp) -> (b h w) (hp wp c)' and cast to bf16 in a
    # single fused XLA pass (one read of x, one half-width write of xp).
    xp = (x.reshape(B, C, h, P, w, P)
            .transpose(0, 2, 4, 3, 5, 1)
            .reshape(B * n_patches, patch_dim)
            .astype(jnp.bfloat16))

    M = B * n_patches
    # Per-row VMEM estimate: 2x bf16 input bufs + 2x output bufs + f32/bf16 temps.
    per_row = (2 * 2 * patch_dim) + (2 * out_bytes * embed_dim) \
              + 8 * patch_dim + 8 * embed_dim
    TM, M_pad = _choose_row_tile(M, per_row)
    if M_pad != M:
        xp = jnp.pad(xp, ((0, M_pad - M), (0, 0)))     # zero rows, sliced later

    # Fold norm1's affine into the linear layer (f32), then cast to bf16.
    w_t = w_lin.T.astype(jnp.float32)                   # (patch_dim, embed_dim)
    w_folded = (g1.astype(jnp.float32)[:, None] * w_t).astype(jnp.bfloat16)
    bias_folded = (b1.astype(jnp.float32) @ w_t
                   + bias_lin.astype(jnp.float32)).reshape(1, embed_dim)
    g2_r = g2.astype(jnp.float32).reshape(1, embed_dim)
    b2_r = b2.astype(jnp.float32).reshape(1, embed_dim)

    # Grid-invariant weight: fetch once; single-buffer it when it is large
    # (matters for v7x's smaller VMEM).
    w_bytes = patch_dim * embed_dim * 2
    if w_bytes > _WEIGHT_SINGLE_BUFFER_BYTES:
        w_spec = pl.BlockSpec((patch_dim, embed_dim), lambda i: (0, 0),
                              pipeline_mode=pl.Buffered(1))
    else:
        w_spec = pl.BlockSpec((patch_dim, embed_dim), lambda i: (0, 0))

    cost = pl.CostEstimate(
        flops=2 * M_pad * patch_dim * embed_dim,
        transcendentals=0,
        bytes_accessed=(M_pad * patch_dim * 2 + w_bytes
                        + 3 * embed_dim * 4 + M_pad * embed_dim * out_bytes))

    out_p = pl.pallas_call(
        _patch_embed_kernel,
        out_shape=jax.ShapeDtypeStruct((M_pad, embed_dim), out_dtype),
        grid_spec=pltpu.PrefetchScalarGridSpec(
            num_scalar_prefetch=0,
            grid=(M_pad // TM,),
            in_specs=[
                pl.BlockSpec((TM, patch_dim), lambda i: (i, 0)),
                w_spec,
                pl.BlockSpec((1, embed_dim), lambda i: (0, 0)),
                pl.BlockSpec((1, embed_dim), lambda i: (0, 0)),
                pl.BlockSpec((1, embed_dim), lambda i: (0, 0)),
            ],
            out_specs=pl.BlockSpec((TM, embed_dim), lambda i: (i, 0)),
        ),
        compiler_params=pltpu.CompilerParams(
            dimension_semantics=("parallel",),
            vmem_limit_bytes=_VMEM_LIMIT_BYTES),
        cost_estimate=cost,
    )(xp, w_folded, bias_folded, g2_r, b2_r)

    out = out_p[:M] if M_pad != M else out_p
    return out.reshape(B, n_patches, embed_dim)


def init_params(key, patch_size, in_channels, embed_dim):
    patch_dim = patch_size * patch_size * in_channels
    k_w, k_b, k_g1, k_b1, k_g2, k_b2 = jax.random.split(key, 6)
    bound = 1.0 / (patch_dim ** 0.5)
    w_lin = jax.random.uniform(k_w, (embed_dim, patch_dim), jnp.float32,
                               -bound, bound)
    bias_lin = jax.random.uniform(k_b, (embed_dim,), jnp.float32, -bound, bound)
    # Perturbed LayerNorm affine params so the scale/shift path is exercised.
    g1 = 1.0 + 0.05 * jax.random.normal(k_g1, (patch_dim,), jnp.float32)
    b1 = 0.05 * jax.random.normal(k_b1, (patch_dim,), jnp.float32)
    g2 = 1.0 + 0.05 * jax.random.normal(k_g2, (embed_dim,), jnp.float32)
    b2 = 0.05 * jax.random.normal(k_b2, (embed_dim,), jnp.float32)
    return (g1, b1, w_lin, bias_lin, g2, b2)


def _reference(x, params, patch_size, *, mirror_kernel=False):
    """Pure-JAX reference matching the PyTorch forward.

    With mirror_kernel=True it replays the kernel's numerics (bf16 activations,
    folded norm1 affine, bf16 matmul operands, f32 accumulation) for a tight
    structural check.
    """
    g1, b1, w_lin, bias_lin, g2, b2 = params
    B, C, H, W = x.shape
    P = patch_size
    h, w = H // P, W // P
    xp = x.reshape(B, C, h, P, w, P).transpose(0, 2, 4, 3, 5, 1)
    xp = xp.reshape(B, h * w, P * P * C).astype(jnp.float32)
    if mirror_kernel:
        xp = xp.astype(jnp.bfloat16).astype(jnp.float32)

    def ln_core(v):
        mu = jnp.mean(v, axis=-1, keepdims=True)
        vc = v - mu
        var = jnp.mean(vc * vc, axis=-1, keepdims=True)
        return vc * jax.lax.rsqrt(var + LN_EPS)

    xn = ln_core(xp)
    w_t = w_lin.T.astype(jnp.float32)
    w_f = g1.astype(jnp.float32)[:, None] * w_t            # fold g1
    bias_f = b1.astype(jnp.float32) @ w_t + bias_lin.astype(jnp.float32)
    if mirror_kernel:
        y = jnp.dot(xn.astype(jnp.bfloat16), w_f.astype(jnp.bfloat16),
                    preferred_element_type=jnp.float32)
    else:
        y = jnp.dot(xn, w_f)
    y = y + bias_f
    out = ln_core(y) * g2 + b2
    return out.astype(x.dtype)


if __name__ == "__main__":
    # Config: in_channels=4, 16x16 images, patch_size=4 -> patch_dim=64, N=16.
    B, C, H, W = 2, 4, 16, 16
    patch_size = 4
    embed_dim = 32

    key = jax.random.PRNGKey(0)
    k_x, k_p = jax.random.split(key)
    x = jax.random.normal(k_x, (B, C, H, W), jnp.float32)
    params = init_params(k_p, patch_size, C, embed_dim)

    out = patch_embedding_forward(x, params, patch_size=patch_size)
    out = jax.block_until_ready(out)

    n_patches = (H // patch_size) * (W // patch_size)
    assert out.shape == (B, n_patches, embed_dim)

    # Tight check against a reference replaying the kernel's bf16 numerics.
    ref_tight = _reference(x, params, patch_size, mirror_kernel=True)
    err_tight = float(jnp.max(jnp.abs(out - ref_tight)))
    assert jnp.allclose(out, ref_tight, atol=2e-3, rtol=2e-3), err_tight

    # Semantic check against the all-f32 PyTorch-equivalent reference
    # (bf16 activations + bf16 MXU operands introduce ~1e-2-level differences).
    ref_f32 = _reference(x, params, patch_size, mirror_kernel=False)
    err_f32 = float(jnp.max(jnp.abs(out - ref_f32)))
    assert jnp.allclose(out, ref_f32, atol=1e-1, rtol=1e-1), err_f32

    print("KERNEL_OK")
</pallas_src>

<mosaic_0001>
module attributes {stable_mosaic.version = 11 : i64} {
  func.func @_patch_embed_kernel(%arg0: i32, %arg1: memref<16x64xbf16, #tpu.memory_space<vmem>>, %arg2: memref<64x32xbf16, #tpu.memory_space<vmem>>, %arg3: memref<1x32xf32, #tpu.memory_space<vmem>>, %arg4: memref<1x32xf32, #tpu.memory_space<vmem>>, %arg5: memref<1x32xf32, #tpu.memory_space<vmem>>, %arg6: memref<16x32xf32, #tpu.memory_space<vmem>>) attributes {dimension_semantics = [#tpu.dimension_semantics<parallel>], iteration_bounds = array<i64: 2>, scalar_prefetch = 0 : i64, scratch_operands = 0 : i64, tpu.core_type = #tpu.core_type<tc>, window_params = [{transform_indices = @transform_0, window_bounds = array<i64: 16, 64>}, {pipeline_mode = #tpu.pipeline_mode<synchronous>, transform_indices = @transform_1, window_bounds = array<i64: 64, 32>}, {pipeline_mode = #tpu.pipeline_mode<synchronous>, transform_indices = @transform_2, window_bounds = array<i64: 1, 32>}, {pipeline_mode = #tpu.pipeline_mode<synchronous>, transform_indices = @transform_3, window_bounds = array<i64: 1, 32>}, {pipeline_mode = #tpu.pipeline_mode<synchronous>, transform_indices = @transform_4, window_bounds = array<i64: 1, 32>}, {transform_indices = @transform_5, window_bounds = array<i64: 16, 32>}]} {
    %c0 = arith.constant 0 : index
    %c0_0 = arith.constant 0 : index
    %0 = vector.load %arg1[%c0, %c0_0] : memref<16x64xbf16, #tpu.memory_space<vmem>>, vector<16x64xbf16>
    %1 = arith.extf %0 : vector<16x64xbf16> to vector<16x64xf32>
    %cst = arith.constant dense<0.000000e+00> : vector<16xf32>
    %2 = vector.multi_reduction <add>, %1, %cst [1] : vector<16x64xf32> to vector<16xf32>
    %3 = vector.shape_cast %2 : vector<16xf32> to vector<16x1xf32>
    %cst_1 = arith.constant 6.400000e+01 : f32
    %4 = vector.broadcast %cst_1 : f32 to vector<16x1xf32>
    %5 = arith.divf %3, %4 : vector<16x1xf32>
    %6 = vector.broadcast %5 : vector<16x1xf32> to vector<16x64xf32>
    %7 = arith.subf %1, %6 : vector<16x64xf32>
    %8 = arith.mulf %7, %7 : vector<16x64xf32>
    %cst_2 = arith.constant dense<0.000000e+00> : vector<16xf32>
    %9 = vector.multi_reduction <add>, %8, %cst_2 [1] : vector<16x64xf32> to vector<16xf32>
    %10 = vector.shape_cast %9 : vector<16xf32> to vector<16x1xf32>
    %cst_3 = arith.constant 6.400000e+01 : f32
    %11 = vector.broadcast %cst_3 : f32 to vector<16x1xf32>
    %12 = arith.divf %10, %11 : vector<16x1xf32>
    %cst_4 = arith.constant 9.99999974E-6 : f32
    %13 = vector.broadcast %cst_4 : f32 to vector<16x1xf32>
    %14 = arith.addf %12, %13 : vector<16x1xf32>
    %15 = math.rsqrt %14 : vector<16x1xf32>
    %16 = vector.broadcast %15 : vector<16x1xf32> to vector<16x64xf32>
    %17 = arith.mulf %7, %16 : vector<16x64xf32>
    %18 = arith.truncf %17 : vector<16x64xf32> to vector<16x64xbf16>
    %c0_5 = arith.constant 0 : index
    %c0_6 = arith.constant 0 : index
    %19 = vector.load %arg2[%c0_5, %c0_6] : memref<64x32xbf16, #tpu.memory_space<vmem>>, vector<64x32xbf16>
    %cst_7 = arith.constant dense<0.000000e+00> : vector<16x32xf32>
    %20 = tpu.matmul %18, %19, %cst_7 {dimension_numbers = #tpu.dot_dimension_numbers<[1], [0], [0], [1], [0, 0, 1, 1], [], []>} : vector<16x64xbf16>, vector<64x32xbf16>, vector<16x32xf32> -> vector<16x32xf32>
    %c0_8 = arith.constant 0 : index
    %c0_9 = arith.constant 0 : index
    %21 = vector.load %arg3[%c0_8, %c0_9] : memref<1x32xf32, #tpu.memory_space<vmem>>, vector<1x32xf32>
    %22 = vector.broadcast %21 : vector<1x32xf32> to vector<16x32xf32>
    %23 = arith.addf %20, %22 : vector<16x32xf32>
    %cst_10 = arith.constant dense<0.000000e+00> : vector<16xf32>
    %24 = vector.multi_reduction <add>, %23, %cst_10 [1] : vector<16x32xf32> to vector<16xf32>
    %25 = vector.shape_cast %24 : vector<16xf32> to vector<16x1xf32>
    %cst_11 = arith.constant 3.200000e+01 : f32
    %26 = vector.broadcast %cst_11 : f32 to vector<16x1xf32>
    %27 = arith.divf %25, %26 : vector<16x1xf32>
    %28 = vector.broadcast %27 : vector<16x1xf32> to vector<16x32xf32>
    %29 = arith.subf %23, %28 : vector<16x32xf32>
    %30 = arith.mulf %29, %29 : vector<16x32xf32>
    %cst_12 = arith.constant dense<0.000000e+00> : vector<16xf32>
    %31 = vector.multi_reduction <add>, %30, %cst_12 [1] : vector<16x32xf32> to vector<16xf32>
    %32 = vector.shape_cast %31 : vector<16xf32> to vector<16x1xf32>
    %cst_13 = arith.constant 3.200000e+01 : f32
    %33 = vector.broadcast %cst_13 : f32 to vector<16x1xf32>
    %34 = arith.divf %32, %33 : vector<16x1xf32>
    %cst_14 = arith.constant 9.99999974E-6 : f32
    %35 = vector.broadcast %cst_14 : f32 to vector<16x1xf32>
    %36 = arith.addf %34, %35 : vector<16x1xf32>
    %37 = math.rsqrt %36 : vector<16x1xf32>
    %38 = vector.broadcast %37 : vector<16x1xf32> to vector<16x32xf32>
    %39 = arith.mulf %29, %38 : vector<16x32xf32>
    %c0_15 = arith.constant 0 : index
    %c0_16 = arith.constant 0 : index
    %40 = vector.load %arg4[%c0_15, %c0_16] : memref<1x32xf32, #tpu.memory_space<vmem>>, vector<1x32xf32>
    %41 = vector.broadcast %40 : vector<1x32xf32> to vector<16x32xf32>
    %42 = arith.mulf %39, %41 : vector<16x32xf32>
    %c0_17 = arith.constant 0 : index
    %c0_18 = arith.constant 0 : index
    %43 = vector.load %arg5[%c0_17, %c0_18] : memref<1x32xf32, #tpu.memory_space<vmem>>, vector<1x32xf32>
    %44 = vector.broadcast %43 : vector<1x32xf32> to vector<16x32xf32>
    %45 = arith.addf %42, %44 : vector<16x32xf32>
    %c0_19 = arith.constant 0 : index
    %c0_20 = arith.constant 0 : index
    %46 = vector.load %arg6[%c0_19, %c0_20] : memref<16x32xf32, #tpu.memory_space<vmem>>, vector<16x32xf32>
    tpu.vector_store %arg6[%c0_19, %c0_20], %45 {strides = array<i32>} : memref<16x32xf32, #tpu.memory_space<vmem>>, vector<16x32xf32>,
    return
  }
  func.func @transform_0(%arg0: i32) -> (i32, i32) {
    %c0_i32 = arith.constant 0 : i32
    %c0_i32_0 = arith.constant 0 : i32
    return %arg0, %c0_i32 : i32, i32
  }
  func.func @transform_1(%arg0: i32) -> (i32, i32) {
    %c0_i32 = arith.constant 0 : i32
    %c0_i32_0 = arith.constant 0 : i32
    %c0_i32_1 = arith.constant 0 : i32
    return %c0_i32, %c0_i32_0 : i32, i32
  }
  func.func @transform_2(%arg0: i32) -> (i32, i32) {
    %c0_i32 = arith.constant 0 : i32
    %c0_i32_0 = arith.constant 0 : i32
    %c0_i32_1 = arith.constant 0 : i32
    return %c0_i32, %c0_i32_0 : i32, i32
  }
  func.func @transform_3(%arg0: i32) -> (i32, i32) {
    %c0_i32 = arith.constant 0 : i32
    %c0_i32_0 = arith.constant 0 : i32
    %c0_i32_1 = arith.constant 0 : i32
    return %c0_i32, %c0_i32_0 : i32, i32
  }
  func.func @transform_4(%arg0: i32) -> (i32, i32) {
    %c0_i32 = arith.constant 0 : i32
    %c0_i32_0 = arith.constant 0 : i32
    %c0_i32_1 = arith.constant 0 : i32
    return %c0_i32, %c0_i32_0 : i32, i32
  }
  func.func @transform_5(%arg0: i32) -> (i32, i32) {
    %c0_i32 = arith.constant 0 : i32
    %c0_i32_0 = arith.constant 0 : i32
    return %arg0, %c0_i32 : i32, i32
  }
}

</mosaic_0001>

<llo_original>
// kernel: patch_embedding_forward.1
$region0: #{patch_embedding_forward.1}
  #allocation0 [shape = 'u32[]', space=smem, size = 0x4, offset = 0x4, fixed_abs, tag = 'smem constant byte address 0x4 - core index']
  #allocation1 [shape = 'u32[144,128]{1,0:T(1,128)}', space=vmem, size = 0x12000, scoped, tag = 'internal scratch']
  %s0 = inlined_call_operand.vmem [shape: bf16[32,64], index: 0, kind: input, shape index: {}]
  %s1 = inlined_call_operand.vmem [shape: bf16[64,32], index: 1, kind: input, shape index: {}]
  %s2 = inlined_call_operand.vmem [shape: f32[1,32], index: 2, kind: input, shape index: {}]
  %s3 = inlined_call_operand.vmem [shape: f32[1,32], index: 3, kind: input, shape index: {}]
  %s4 = inlined_call_operand.vmem [shape: f32[1,32], index: 4, kind: input, shape index: {}]
  %s5 = inlined_call_operand.hbm [shape: f32[32,32], index: 5, kind: output, shape index: {}]
  %s6 = sld [smem:[#allocation0]]
  $region53: #{patch_embedding_forward.1} parent=0
    _
  %s8 = ssub.s32 1, %s6
  %s9 = scalar_select 0, %s8, %s6
  $region1: #{patch_embedding_forward.1} parent=0
    #allocation2 [shape = 'u8[16384]{0}', space=vmem, size = 0x4000, scoped, tag = 'output window, operand 0']
    #allocation3 [shape = 's32[2]{0}', space=sflag, size = 0x8, scoped, tag = 'scoped memory for patch_embedding_forward.1']
    %10 = vsyncpa [#allocation3], 0
    %s11 = scalar_lea.sflag [#allocation3], 1
    %12 = vsyncpa %s11, 0
    loop: start=0, step=1, limit=4
    $region2: #{patch_embedding_forward.1} parent=1 // loop_pre_header
      _
    $region3: #{patch_embedding_forward.1} parent=1 // loop_header
      %s14 = sphi 0, %s18
      %p15 = scmp.ge.s32.totalorder %s14, 4
      %s24 = sphi 0, %s26
      %s27 = sphi 0, %s24
      %s28 = sphi 0, %s27
      %s44 = sphi 0, %s28
      %s48 = sphi 0, %s48
      %s50 = sphi 0, %s48
      %s51 = sphi 0, %s50
      %s65 = sphi 0, %s51
      %s69 = sphi 0, %s69
      %s71 = sphi 0, %s69
      %s72 = sphi 0, %s71
      %s86 = sphi 0, %s72
      %s90 = sphi 0, %s90
      %s92 = sphi 0, %s90
      %s93 = sphi 0, %s92
      %s107 = sphi 0, %s93
      %s111 = sphi 0, %s111
      %s113 = sphi 0, %s111
      %s114 = sphi 0, %s113
      %s128 = sphi 0, %s114
      %s134 = sphi 0, %s136
      %s137 = sphi 0, %s134
      %s138 = sphi 0, %s137
      %s154 = sphi 0, %s138
    $region4: #{patch_embedding_forward.1} parent=1 // loop_header_branch
      %17 = sbr.rel (%p15) target = $region8
    $region5: #{patch_embedding_forward.1} parent=1 // loop_body
      %s19 = ssub.s32 %s14, 1
      %s20 = ssub.s32 %s14, 2
      %s21 = sadd.s32 %s14, 1
      %s22 = ssub.s32 %s14, %s21
      %p23 = scmp.eq.s32.totalorder %s22, 0
      %s25 = sadd.s32 %s24, 1
      %s26 = scalar_select %p23, %s24, %s25
      %p29 = pneg %p23
      %p30 = scmp.eq.s32.totalorder %s14, 1
      %p31 = por %p29, %p30
      %p32 = scmp.ne.s32.totalorder %s24, %s27
      %p33 = scmp.eq.s32.totalorder %s14, 0
      %p34 = por %p32, %p33
      %p35 = scmp.ne.s32.totalorder %s24, %s27
      %p36 = scmp.eq.s32.totalorder %s19, 1
      %p37 = por %p35, %p36
      %p38 = scmp.ne.s32.totalorder %s27, %s28
      %p39 = scmp.eq.s32.totalorder %s19, 0
      %p40 = por %p38, %p39
      %p41 = scmp.ne.s32.totalorder %s27, %s28
      %p42 = scmp.eq.s32.totalorder %s20, 1
      %p43 = por %p41, %p42
      %p45 = scmp.ne.s32.totalorder %s28, %s44
      %p46 = scmp.eq.s32.totalorder %s20, 0
      %p47 = por %p45, %p46
      %s49 = sadd.s32 %s48, 1
      %p52 = scmp.eq.s32.totalorder %s14, 1
      %p53 = scmp.ne.s32.totalorder %s48, %s50
      %p54 = scmp.eq.s32.totalorder %s14, 0
      %p55 = por %p53, %p54
      %p56 = scmp.ne.s32.totalorder %s48, %s50
      %p57 = scmp.eq.s32.totalorder %s19, 1
      %p58 = por %p56, %p57
      %p59 = scmp.ne.s32.totalorder %s50, %s51
      %p60 = scmp.eq.s32.totalorder %s19, 0
      %p61 = por %p59, %p60
      %p62 = scmp.ne.s32.totalorder %s50, %s51
      %p63 = scmp.eq.s32.totalorder %s20, 1
      %p64 = por %p62, %p63
      %p66 = scmp.ne.s32.totalorder %s51, %s65
      %p67 = scmp.eq.s32.totalorder %s20, 0
      %p68 = por %p66, %p67
      %s70 = sadd.s32 %s69, 1
      %p73 = scmp.eq.s32.totalorder %s14, 1
      %p74 = scmp.ne.s32.totalorder %s69, %s71
      %p75 = scmp.eq.s32.totalorder %s14, 0
      %p76 = por %p74, %p75
      %p77 = scmp.ne.s32.totalorder %s69, %s71
      %p78 = scmp.eq.s32.totalorder %s19, 1
      %p79 = por %p77, %p78
      %p80 = scmp.ne.s32.totalorder %s71, %s72
      %p81 = scmp.eq.s32.totalorder %s19, 0
      %p82 = por %p80, %p81
      %p83 = scmp.ne.s32.totalorder %s71, %s72
      %p84 = scmp.eq.s32.totalorder %s20, 1
      %p85 = por %p83, %p84
      %p87 = scmp.ne.s32.totalorder %s72, %s86
      %p88 = scmp.eq.s32.totalorder %s20, 0
      %p89 = por %p87, %p88
      %s91 = sadd.s32 %s90, 1
      %p94 = scmp.eq.s32.totalorder %s14, 1
      %p95 = scmp.ne.s32.totalorder %s90, %s92
      %p96 = scmp.eq.s32.totalorder %s14, 0
      %p97 = por %p95, %p96
      %p98 = scmp.ne.s32.totalorder %s90, %s92
      %p99 = scmp.eq.s32.totalorder %s19, 1
      %p100 = por %p98, %p99
      %p101 = scmp.ne.s32.totalorder %s92, %s93
      %p102 = scmp.eq.s32.totalorder %s19, 0
      %p103 = por %p101, %p102
      %p104 = scmp.ne.s32.totalorder %s92, %s93
      %p105 = scmp.eq.s32.totalorder %s20, 1
      %p106 = por %p104, %p105
      %p108 = scmp.ne.s32.totalorder %s93, %s107
      %p109 = scmp.eq.s32.totalorder %s20, 0
      %p110 = por %p108, %p109
      %s112 = sadd.s32 %s111, 1
      %p115 = scmp.eq.s32.totalorder %s14, 1
      %p116 = scmp.ne.s32.totalorder %s111, %s113
      %p117 = scmp.eq.s32.totalorder %s14, 0
      %p118 = por %p116, %p117
      %p119 = scmp.ne.s32.totalorder %s111, %s113
      %p120 = scmp.eq.s32.totalorder %s19, 1
      %p121 = por %p119, %p120
      %p122 = scmp.ne.s32.totalorder %s113, %s114
      %p123 = scmp.eq.s32.totalorder %s19, 0
      %p124 = por %p122, %p123
      %p125 = scmp.ne.s32.totalorder %s113, %s114
      %p126 = scmp.eq.s32.totalorder %s20, 1
      %p127 = por %p125, %p126
      %p129 = scmp.ne.s32.totalorder %s114, %s128
      %p130 = scmp.eq.s32.totalorder %s20, 0
      %p131 = por %p129, %p130
      %s132 = ssub.s32 %s14, %s21
      %p133 = scmp.eq.s32.totalorder %s132, 0
      %s135 = sadd.s32 %s134, 1
      %s136 = scalar_select %p133, %s134, %s135
      %p139 = pneg %p133
      %p140 = scmp.eq.s32.totalorder %s14, 1
      %p141 = por %p139, %p140
      %p142 = scmp.ne.s32.totalorder %s134, %s137
      %p143 = scmp.eq.s32.totalorder %s14, 0
      %p144 = por %p142, %p143
      %p145 = scmp.ne.s32.totalorder %s134, %s137
      %p146 = scmp.eq.s32.totalorder %s19, 1
      %p147 = por %p145, %p146
      %p148 = scmp.ne.s32.totalorder %s137, %s138
      %p149 = scmp.eq.s32.totalorder %s19, 0
      %p150 = por %p148, %p149
      %p151 = scmp.ne.s32.totalorder %s137, %s138
      %p152 = scmp.eq.s32.totalorder %s20, 1
      %p153 = por %p151, %p152
      %p155 = scmp.ne.s32.totalorder %s138, %s154
      %p156 = scmp.eq.s32.totalorder %s20, 0
      %p157 = por %p155, %p156
      %p158 = scmp.le.s32.totalorder 1, %s14
      %p159 = scmp.lt.s32.totalorder %s14, 3
      %p160 = pnand %p158, %p159
      %p161 = pneg %p160
      // Predicated region
      $region9: #{patch_embedding_forward.1} parent=5 // pred_check
        _
      $region10: #{patch_embedding_forward.1} parent=5 // pred_check_branch
        %163 = sbr.rel (%p160) target = $region12
      $region11: #{patch_embedding_forward.1} parent=5 // pred_region
        %s164 = ssub.s32 %s14, 1
        // Predicated region
        $region13: #{patch_embedding_forward.1} parent=11 // pred_check
          %p165 = pneg %p61
        $region14: #{patch_embedding_forward.1} parent=11 // pred_check_branch
          %167 = sbr.rel (%p165) target = $region16
        $region15: #{patch_embedding_forward.1} parent=11 // pred_region
          _
        $region16: #{patch_embedding_forward.1} parent=11 // pred_fallthru
          _
        // Predicated region
        $region17: #{patch_embedding_forward.1} parent=11 // pred_check
          %p168 = pneg %p82
        $region18: #{patch_embedding_forward.1} parent=11 // pred_check_branch
          %170 = sbr.rel (%p168) target = $region20
        $region19: #{patch_embedding_forward.1} parent=11 // pred_region
          _
        $region20: #{patch_embedding_forward.1} parent=11 // pred_fallthru
          _
        // Predicated region
        $region21: #{patch_embedding_forward.1} parent=11 // pred_check
          %p171 = pneg %p103
        $region22: #{patch_embedding_forward.1} parent=11 // pred_check_branch
          %173 = sbr.rel (%p171) target = $region24
        $region23: #{patch_embedding_forward.1} parent=11 // pred_region
          _
        $region24: #{patch_embedding_forward.1} parent=11 // pred_fallthru
          _
        // Predicated region
        $region25: #{patch_embedding_forward.1} parent=11 // pred_check
          %p174 = pneg %p124
        $region26: #{patch_embedding_forward.1} parent=11 // pred_check_branch
          %176 = sbr.rel (%p174) target = $region28
        $region27: #{patch_embedding_forward.1} parent=11 // pred_region
          _
        $region28: #{patch_embedding_forward.1} parent=11 // pred_fallthru
          _
      $region12: #{patch_embedding_forward.1} parent=5 // pred_fallthru
        _
      %p177 = scmp.lt.s32.totalorder %s14, 2
      // Predicated region
      $region29: #{patch_embedding_forward.1} parent=5 // pred_check
        %p178 = pneg %p177
      $region30: #{patch_embedding_forward.1} parent=5 // pred_check_branch
        %180 = sbr.rel (%p178) target = $region32
      $region31: #{patch_embedding_forward.1} parent=5 // pred_region
        // Predicated region
        $region33: #{patch_embedding_forward.1} parent=31 // pred_check
          %p181 = pneg %p34
        $region34: #{patch_embedding_forward.1} parent=31 // pred_check_branch
          %183 = sbr.rel (%p181) target = $region36
        $region35: #{patch_embedding_forward.1} parent=31 // pred_region
          %s184 = smul.u32 2, %s14
          %p185 = scmp.lt.s32.totalorder %s184, 3
          %s186 = scalar_select %p185, %s184, 3
          %s187 = smul.addr %s186, 4
          %s188 = scalar_lea.vmem %s0, %s187
          %s189 = smul.u32 2, %s14
        $region36: #{patch_embedding_forward.1} parent=31 // pred_fallthru
          _
      $region32: #{patch_embedding_forward.1} parent=5 // pred_fallthru
        _
      %p190 = scmp.le.s32.totalorder 1, %s14
      %p191 = scmp.lt.s32.totalorder %s14, 3
      %p192 = pnand %p190, %p191
      %p193 = pneg %p192
      // Predicated region
      $region37: #{patch_embedding_forward.1} parent=5 // pred_check
        _
      $region38: #{patch_embedding_forward.1} parent=5 // pred_check_branch
        %195 = sbr.rel (%p192) target = $region40
      $region39: #{patch_embedding_forward.1} parent=5 // pred_region
        %s196 = ssub.s32 %s14, 1
        %s197 = smul.u32 2, %s19
        %p198 = scmp.lt.s32.totalorder %s197, 3
        %s199 = scalar_select %p198, %s197, 3
        %s200 = smul.addr %s199, 4
        %s201 = scalar_lea.vmem %s0, %s200
        %p202 = pneg %p40
        %p203 = pneg %p37
        %p204 = pneg %p61
        %p205 = pneg %p58
        %p206 = pneg %p82
        %p207 = pneg %p79
        %p208 = pneg %p103
        %p209 = pneg %p100
        %p210 = pneg %p124
        %p211 = pneg %p121
        %p212 = pneg %p150
        %p213 = pneg %p147
        %s214 = sand.u32 %s137, 1
        %s215 = scalar_lea.sflag [#allocation3], %s214
        %s216 = sand.u32 %s137, 1
        %s217 = smul.addr %s216, 16
        %s218 = scalar_lea.vmem [#allocation2], %s217
        %s219 = smul.u32 2, %s19
        %p220 = scmp.lt.s32.totalorder %s219, 3
        %s221 = scalar_select %p220, %s219, 3
        %s222 = smul.addr %s221, 4
        %s223 = scalar_lea.vmem %s0, %s222
        %s224 = smul.u32 2, %s19
        %s225 = smul.u32 2, %s19
        %v227 = vld [vmem:[%s223] sm:$0xf]
        %v228 = vld [vmem:[%s223 + $0x4] sm:$0xf]
        %v229 = vunpack.c.l.bf16 %v227
        %v230 = vunpack.c.l.bf16 %v228
        %vm231 = vcmask 523264
        %v232 = vsel %vm231, %v229, 0.0
        %233 = vadd.xlane.f32.xlu0 %v232
        %v234 = vpop.xlane.xlu0 %233
        %v235 = vsel %vm231, %v230, 0.0
        %236 = vadd.xlane.f32.xlu0 %v235
        %v237 = vpop.xlane.xlu0 %236
        %v238 = vrcp.pop 64.0
        %v239 = vmul.f32 %v234, %v238
        %v240 = vmul.f32 %v237, %v238
        %v241 = vsub.f32 %v229, %v239
        %v242 = vsub.f32 %v230, %v240
        %v243 = vmul.f32 %v241, %v241
        %v244 = vmul.f32 %v242, %v242
        %v245 = vsel %vm231, %v243, 0.0
        %246 = vadd.xlane.f32.xlu0 %v245
        %v247 = vpop.xlane.xlu0 %246
        %v248 = vsel %vm231, %v244, 0.0
        %249 = vadd.xlane.f32.xlu0 %v248
        %v250 = vpop.xlane.xlu0 %249
        %v251 = vmul.f32 %v247, %v238
        %v252 = vmul.f32 %v250, %v238
        %v253 = vadd.f32 %v251, 1e-05
        %v254 = vadd.f32 %v252, 1e-05
        %v255 = vrsqrt.pop %v253
        %v256 = vrsqrt.pop %v254
        %v257 = vmul.f32 %v241, %v255
        %v258 = vmul.f32 %v242, %v256
        %v259 = vpack.c.bf16 %v258, %v257
        %v260 = vld [vmem:[%s1] sm:$0xf]
        %v261 = vld [vmem:[%s1 + $0x4] sm:$0xf]
        %v262 = vld [vmem:[%s1 + $0x8] sm:$0xf]
        %v263 = vld [vmem:[%s1 + $0xc] sm:$0xf]
        %v264 = vld [vmem:[%s1 + $0x10] sm:$0xf]
        %v265 = vld [vmem:[%s1 + $0x14] sm:$0xf]
        %v266 = vld [vmem:[%s1 + $0x18] sm:$0xf]
        %v267 = vld [vmem:[%s1 + $0x1c] sm:$0xf]
        %v268 = vld [vmem:[%s2] sm:$0x1]
        %v270 = vlaneseq
        %v271 = vshrl.u32 %v270, 7
        %v272 = vsub.s32 0, %v271
        %v273 = vrot.slane %v268, %v272
        %v283 = vunpack.c.l.b16 %v260
        %v284 = vunpack.c.l.b16 %v261
        %v285 = vunpack.c.l.b16 %v262
        %v286 = vunpack.c.l.b16 %v263
        %v287 = vunpack.c.l.b16 %v264
        %v288 = vunpack.c.l.b16 %v265
        %v289 = vunpack.c.l.b16 %v266
        %v290 = vunpack.c.l.b16 %v267
        %v291 = vpack.c.b16 %v284, %v283
        %v292 = vpack.c.b16 %v286, %v285
        %v293 = vpack.c.b16 %v288, %v287
        %v294 = vpack.c.b16 %v290, %v289
        %v300 = vsel %vm231, %v259, 0
        %302 = vmatprep.subr.bf16.mxu0 0
        %303 = vmatpush1.bf16.msra.mxu0 0
        %304 = vmatprep.subr.bf16.mxu0 0
        %305 = vmatpush1.bf16.msra.mxu0 0
        %306 = vmatprep.subr.bf16.mxu0 0
        %307 = vmatpush1.bf16.msra.mxu0 0
        %308 = vmatprep.subr.bf16.mxu0 0
        %309 = vmatpush1.bf16.msra.mxu0 0
        %310 = vmatprep.subr.bf16.mxu0 0
        %311 = vmatpush1.bf16.msra.mxu0 %v294
        %312 = vmatprep.subr.bf16.mxu0 0
        %313 = vmatpush1.bf16.msra.mxu0 %v293
        %314 = vmatprep.subr.bf16.mxu0 0
        %315 = vmatpush1.bf16.msra.mxu0 %v292
        %316 = vmatprep.subr.bf16.mxu0 0
        %317 = vmatpush1.bf16.msra.mxu0 %v291
        %318 = vmatprep.subr.bf16.mxu0 0
        %319 = vmatpush2.bf16.msra.mxu0 0
        %320 = vmatprep.subr.bf16.mxu0 0
        %321 = vmatpush2.bf16.msra.mxu0 0
        %322 = vmatprep.subr.bf16.mxu0 0
        %323 = vmatpush2.bf16.msra.mxu0 0
        %324 = vmatprep.subr.bf16.mxu0 0
        %325 = vmatpush2.bf16.msra.mxu0 0
        %326 = vmatprep.subr.bf16.mxu0 0
        %327 = vmatpush2.bf16.msra.mxu0 0
        %328 = vmatprep.subr.bf16.mxu0 0
        %329 = vmatpush2.bf16.msra.mxu0 0
        %330 = vmatprep.subr.bf16.mxu0 0
        %331 = vmatpush2.bf16.msra.mxu0 0
        %332 = vmatprep.subr.bf16.mxu0 0
        %333 = vmatpush2.bf16.msra.mxu0 0
        %334 = vmatprep.mubr.bf16.mxu0 0
        %335 = vmatmul.mubr.bf16.gmra.mxu0 %v300
        %v336 = vpop.f32.mrf.mxu0
        %v337 = vadd.f32 %v273, %v336
        %v338 = vpop.f32.mrf.mxu0
        %v339 = vpop.f32.mrf.mxu0
        %v340 = vadd.f32 %v273, %v339
        %v341 = vpop.f32.mrf.mxu0
        %342 = vdwg.mxu0
        %vm343 = vcmask 261120
        %v344 = vsel %vm343, %v337, 0.0
        %345 = vadd.xlane.f32.xlu0 %v344
        %v346 = vpop.xlane.xlu0 %345
        %v347 = vsel %vm343, %v340, 0.0
        %348 = vadd.xlane.f32.xlu0 %v347
        %v349 = vpop.xlane.xlu0 %348
        %v350 = vrcp.pop 32.0
        %v351 = vmul.f32 %v346, %v350
        %v352 = vmul.f32 %v349, %v350
        %v353 = vsub.f32 %v337, %v351
        %v354 = vsub.f32 %v340, %v352
        %v355 = vmul.f32 %v353, %v353
        %v356 = vmul.f32 %v354, %v354
        %v357 = vsel %vm343, %v355, 0.0
        %358 = vadd.xlane.f32.xlu0 %v357
        %v359 = vpop.xlane.xlu0 %358
        %v360 = vsel %vm343, %v356, 0.0
        %361 = vadd.xlane.f32.xlu0 %v360
        %v362 = vpop.xlane.xlu0 %361
        %v363 = vmul.f32 %v359, %v350
        %v364 = vmul.f32 %v362, %v350
        %v365 = vadd.f32 %v363, 1e-05
        %v366 = vadd.f32 %v364, 1e-05
        %v367 = vrsqrt.pop %v365
        %v368 = vrsqrt.pop %v366
        %v369 = vmul.f32 %v353, %v367
        %v370 = vmul.f32 %v354, %v368
        %v371 = vld [vmem:[%s3] sm:$0x1]
        %v373 = vlaneseq
        %v374 = vshrl.u32 %v373, 7
        %v375 = vsub.s32 0, %v374
        %v376 = vrot.slane %v371, %v375
        %v378 = vmul.f32 %v369, %v376
        %v379 = vmul.f32 %v370, %v376
        %v380 = vld [vmem:[%s4] sm:$0x1]
        %v382 = vlaneseq
        %v383 = vshrl.u32 %v382, 7
        %v384 = vsub.s32 0, %v383
        %v385 = vrot.slane %v380, %v384
        %v387 = vadd.f32 %v378, %v385
        %v388 = vadd.f32 %v379, %v385
        %389 = vst.msk [vmem:[%s218] sm:$0xff] %vm343, %v387
        %390 = vst.msk [vmem:[%s218 + $0x8] sm:$0xff] %vm343, %v388
        %s391 = sand.u32 %s137, 1
        %s392 = scalar_lea.sflag [#allocation3], %s391
        %s393 = sand.u32 %s137, 1
        %s394 = smul.addr %s393, 16
        %s395 = scalar_lea.vmem [#allocation2], %s394
        // Predicated region
        $region41: #{patch_embedding_forward.1} parent=39 // pred_check
          %p396 = pneg %p147
        $region42: #{patch_embedding_forward.1} parent=39 // pred_check_branch
          %398 = sbr.rel (%p396) target = $region44
        $region43: #{patch_embedding_forward.1} parent=39 // pred_region
          %s399 = smul.u32 2, %s19
          %s401 = ssub.s32 256, 256
          %402 = vsyncadd %s392, %s401
          %s403 = smul.addr %s399, 128
          %s404 = scalar_lea.hbm %s5, %s403
          %s405 = sshll.u32 %s395, 4
          %s406 = int_to_ptr.vmem [resolvable:$true] %s405
          %411 = dma.vmem_to_hbm [thread:$0]  %s406, 256, %s404, %s392, 128, 128, 8
        $region44: #{patch_embedding_forward.1} parent=39 // pred_fallthru
          _
      $region40: #{patch_embedding_forward.1} parent=5 // pred_fallthru
        _
      %p412 = scmp.le.s32.totalorder 2, %s14
      // Predicated region
      $region45: #{patch_embedding_forward.1} parent=5 // pred_check
        %p413 = pneg %p412
      $region46: #{patch_embedding_forward.1} parent=5 // pred_check_branch
        %415 = sbr.rel (%p413) target = $region48
      $region47: #{patch_embedding_forward.1} parent=5 // pred_region
        %s416 = ssub.s32 %s14, 2
        // Predicated region
        $region49: #{patch_embedding_forward.1} parent=47 // pred_check
          %p417 = pneg %p153
        $region50: #{patch_embedding_forward.1} parent=47 // pred_check_branch
          %419 = sbr.rel (%p417) target = $region52
        $region51: #{patch_embedding_forward.1} parent=47 // pred_region
          %s420 = sand.u32 %s138, 1
          %s421 = scalar_lea.sflag [#allocation3], %s420
          %s422 = sand.u32 %s138, 1
          %s423 = smul.addr %s422, 16
          %s424 = scalar_lea.vmem [#allocation2], %s423
          %425 = dma.done %s421, 256
        $region52: #{patch_embedding_forward.1} parent=47 // pred_fallthru
          _
      $region48: #{patch_embedding_forward.1} parent=5 // pred_fallthru
        _
    $region6: #{patch_embedding_forward.1} parent=1 // loop_footer
      %s18 = sadd.s32 1, %s14
    $region7: #{patch_embedding_forward.1} parent=1 // loop_footer_branch
      %13 = sbr.rel target = $region3
    $region8: #{patch_embedding_forward.1} parent=1 // loop_exit
      _
    %426 = vsyncpa [#allocation3], 1
    %s427 = scalar_lea.sflag [#allocation3], 1
    %428 = vsyncpa %s427, 1

</llo_original>
